<compile_context>
chip_gen: v5e
topology: v5e:2x2
jax: 0.10.0
libtpu: 0.0.40
codegen_flags: <defaults>
</compile_context>

<pallas_src>
import functools
import math

import jax
import jax.numpy as jnp
from jax.experimental import pallas as pl
from jax.experimental.pallas import tpu as pltpu


def _chunk_sizes(length, nb_chunks):
    """torch.tensor_split / numpy.array_split chunk sizes along the split dim."""
    base, rem = divmod(length, nb_chunks)
    return [base + 1] * rem + [base] * (nb_chunks - rem)


def _generation_budget():
    """(target input-block bytes, vmem_limit_bytes), tuned per TPU generation."""
    kind = ""
    try:
        kind = jax.devices()[0].device_kind.lower()
    except Exception:
        pass
    if ("v5 lite" in kind) or ("v5e" in kind) or ("v5lite" in kind):
        # v5e: 16 MiB scoped-VMEM default, single vector-store slot.
        return 3 << 20, 16 << 20
    vmem_cap = None
    try:
        vmem_cap = pltpu.get_tpu_info().vmem_capacity_bytes
    except Exception:
        vmem_cap = None
    if vmem_cap is not None and vmem_cap > (64 << 20):
        # v6e-class: 128 MiB physical VMEM -> big blocks amortize step overhead.
        return 8 << 20, 40 << 20
    # v7x-class (64 MiB physical, 32 MiB scoped default) or unknown: stay safe.
    return 6 << 20, 30 << 20


def _split_vmem_kernel(x_ref, *o_refs, col_starts):
    # x_ref is a (tile_rows, ncols) tile; each chunk is a static, lane-aligned
    # column slice -> plain vector loads and unmasked lane-dense vst stores.
    for o_ref, start in zip(o_refs, col_starts):
        width = o_ref.shape[-1]
        o_ref[...] = x_ref[:, start:start + width]


def _split_dma_kernel(x_ref, *rest, col_starts):
    # Pure-DMA split: input and outputs stay in HBM; each chunk is one strided
    # async copy issued in parallel, then all waited on.
    n = len(col_starts)
    o_refs, sem = rest[:n], rest[n]
    copies = []
    for i, (o_ref, start) in enumerate(zip(o_refs, col_starts)):
        width = o_ref.shape[-1]
        cp = pltpu.make_async_copy(
            x_ref.at[:, start:start + width], o_ref, sem.at[i])
        cp.start()
        copies.append(cp)
    for cp in copies:
        cp.wait()


def _pick_tile_rows(outer, row_bytes, sublane_mult, target_block_bytes):
    rows_budget = max(sublane_mult, target_block_bytes // max(1, row_bytes))
    if outer >= 2 * sublane_mult:
        # Guarantee at least two grid steps so both v7x TensorCores get work.
        rows_budget = min(rows_budget, (outer + 1) // 2)
    rows_budget = min(rows_budget, outer)
    # Round down to the dtype-native sublane multiple (full vregs, no relayout).
    cap = max(sublane_mult, (rows_budget // sublane_mult) * sublane_mult)
    # Prefer a tile height that evenly divides `outer` (no padded ragged last
    # block), but never shrink the tile by more than ~2x to get it.
    t = cap
    while t >= max(sublane_mult, cap // 2):
        if outer % t == 0:
            return t
        t -= sublane_mult
    return cap


def split_pallas(x, nb_chunks=2, dim=1):
    """Pallas implementation of torch.tensor_split(x, nb_chunks, dim)."""
    ndim = x.ndim
    dim = dim % ndim
    length = x.shape[dim]

    sizes = _chunk_sizes(length, nb_chunks)
    offsets = [0]
    for s in sizes[:-1]:
        offsets.append(offsets[-1] + s)

    outer = math.prod(x.shape[:dim])
    inner = math.prod(x.shape[dim + 1:])
    ncols = length * inner

    chunk_shapes = [x.shape[:dim] + (s,) + x.shape[dim + 1:] for s in sizes]
    widths = [s * inner for s in sizes]
    col_starts = [o * inner for o in offsets]
    nonzero = [i for i, w in enumerate(widths) if w > 0]

    # Degenerate inputs / empty chunks: no kernel needed for those outputs.
    if not nonzero or outer == 0 or ncols == 0:
        return [jnp.zeros(shp, x.dtype) for shp in chunk_shapes]

    # Collapse to 2D: every chunk is a contiguous column slice of this view.
    # (Free for the default row-major dense layout of JAX arrays.)
    x2 = x.reshape(outer, ncols)

    itemsize = jnp.dtype(x.dtype).itemsize
    row_bytes = ncols * itemsize
    total_bytes = outer * row_bytes
    cost = pl.CostEstimate(flops=0, transcendentals=0,
                           bytes_accessed=int(2 * total_bytes))

    target_block_bytes, vmem_limit_bytes = _generation_budget()
    # Double-buffered in + out blocks are ~4x one input block; keep headroom.
    max_block_bytes = vmem_limit_bytes // 5

    packing = max(1, 4 // itemsize)      # sub-32-bit dtypes pack along sublanes
    sublane_mult = 8 * packing

    aligned = all(col_starts[i] % 128 == 0 and widths[i] % 128 == 0
                  for i in nonzero)
    use_vmem_path = (aligned
                     and outer >= sublane_mult
                     and sublane_mult * row_bytes <= max_block_bytes)

    kernel_col_starts = tuple(col_starts[i] for i in nonzero)
    out_shapes = tuple(jax.ShapeDtypeStruct((outer, widths[i]), x.dtype)
                       for i in nonzero)

    if use_vmem_path:
        tile_rows = _pick_tile_rows(outer, row_bytes, sublane_mult,
                                    target_block_bytes)
        grid = (pl.cdiv(outer, tile_rows),)
        outs2d = pl.pallas_call(
            functools.partial(_split_vmem_kernel, col_starts=kernel_col_starts),
            out_shape=out_shapes,
            grid=grid,
            in_specs=[pl.BlockSpec((tile_rows, ncols), lambda r: (r, 0))],
            out_specs=tuple(
                pl.BlockSpec((tile_rows, widths[i]), lambda r: (r, 0))
                for i in nonzero),
            compiler_params=pltpu.CompilerParams(
                dimension_semantics=("parallel",),
                vmem_limit_bytes=vmem_limit_bytes),
            cost_estimate=cost,
        )(x2)
    else:
        # DMA path: unaligned chunk widths, tiny `outer` (incl. outer == 1 /
        # leading-dim splits -> each chunk is one fully contiguous run), or
        # rows too wide for a VMEM tile.  HBM -> HBM strided copies per chunk.
        outs2d = pl.pallas_call(
            functools.partial(_split_dma_kernel, col_starts=kernel_col_starts),
            out_shape=out_shapes,
            in_specs=[pl.BlockSpec(memory_space=pl.ANY)],
            out_specs=tuple(pl.BlockSpec(memory_space=pl.ANY)
                            for _ in nonzero),
            scratch_shapes=[pltpu.SemaphoreType.DMA((len(nonzero),))],
            cost_estimate=cost,
        )(x2)

    if not isinstance(outs2d, (list, tuple)):
        outs2d = (outs2d,)

    # Reassemble in chunk order (free contiguous reshapes back to N-D).
    result = [None] * nb_chunks
    for o2d, i in zip(outs2d, nonzero):
        result[i] = o2d.reshape(chunk_shapes[i])
    for i in range(nb_chunks):
        if result[i] is None:
            result[i] = jnp.zeros(chunk_shapes[i], x.dtype)
    return result


def _check(x, nb_chunks, dim, tag):
    outs = jax.block_until_ready(split_pallas(x, nb_chunks=nb_chunks, dim=dim))
    refs = jnp.array_split(x, nb_chunks, axis=dim)
    assert len(outs) == len(refs), tag
    for o, r in zip(outs, refs):
        assert o.shape == r.shape, (tag, o.shape, r.shape)
        assert o.dtype == r.dtype, (tag, o.dtype, r.dtype)
        assert bool(jnp.array_equal(o, r)), f"Pallas split mismatch: {tag}"


if __name__ == "__main__":
    key = jax.random.PRNGKey(0)

    # Small NCHW activation; Split(nb_chunks=2, dim=1): [2,4,16,16] -> 2 x [2,2,16,16]
    x = jax.random.normal(key, (2, 4, 16, 16), dtype=jnp.float32)
    _check(x, 2, 1, "small f32, dim=1, 2 chunks (DMA path)")
    _check(x, 3, 1, "small f32, dim=1, uneven 3 chunks (DMA path)")

    # Leading-dim split (outer == 1): each chunk is one contiguous DMA run.
    _check(x, 2, 0, "dim=0 split (DMA path, outer==1)")

    # Last-dim split: chunk columns not 128-lane aligned -> DMA path.
    _check(x, 2, -1, "dim=-1 split (DMA path, unaligned)")

    # Larger f32 input: lane-aligned, row-tiled VMEM path with >=2 parallel steps.
    xb = jax.random.normal(jax.random.PRNGKey(1), (128, 8, 32, 32),
                           dtype=jnp.float32)
    _check(xb, 2, 1, "large f32, dim=1 (VMEM tiled path)")

    # bf16 input: exercises the 16-row (packed-sublane) tile rounding.
    xh = jax.random.normal(jax.random.PRNGKey(2), (64, 6, 16, 16),
                           dtype=jnp.bfloat16)
    _check(xh, 3, 1, "bf16, dim=1, 3 chunks (VMEM tiled path)")

    print("KERNEL_OK")
</pallas_src>

<mosaic_0001>
module attributes {stable_mosaic.version = 11 : i64} {
  func.func @_split_dma_kernel(%arg0: memref<2x1024xf32, #tpu.memory_space<any>>, %arg1: memref<2x512xf32, #tpu.memory_space<any>>, %arg2: memref<2x512xf32, #tpu.memory_space<any>>, %arg3: memref<2x!tpu.dma_semaphore, #tpu.memory_space<semaphore_mem>>) attributes {dimension_semantics = [], scalar_prefetch = 0 : i64, scratch_operands = 1 : i64, tpu.core_type = #tpu.core_type<tc>} {
    %c0_i32 = arith.constant 0 : i32
    %c0_i32_0 = arith.constant 0 : i32
    %c0_i32_1 = arith.constant 0 : i32
    %0 = tpu.memref_slice %arg0[%c0_i32_0, %c0_i32_1] : memref<2x1024xf32, #tpu.memory_space<any>> -> memref<2x512xf32, #tpu.memory_space<any>>
    %1 = tpu.memref_slice %arg3[%c0_i32] : memref<2x!tpu.dma_semaphore, #tpu.memory_space<semaphore_mem>> -> memref<1x!tpu.dma_semaphore, #tpu.memory_space<semaphore_mem>>
    %2 = tpu.memref_squeeze %1 : memref<1x!tpu.dma_semaphore, #tpu.memory_space<semaphore_mem>> -> memref<!tpu.dma_semaphore, #tpu.memory_space<semaphore_mem>>
    tpu.enqueue_dma source(%0 : memref<2x512xf32, #tpu.memory_space<any>>) target(%arg1 : memref<2x512xf32, #tpu.memory_space<any>>) target_semaphore(%2 : memref<!tpu.dma_semaphore, #tpu.memory_space<semaphore_mem>>)
    %c1_i32 = arith.constant 1 : i32
    %c0_i32_2 = arith.constant 0 : i32
    %c512_i32 = arith.constant 512 : i32
    %3 = tpu.memref_slice %arg0[%c0_i32_2, %c512_i32] : memref<2x1024xf32, #tpu.memory_space<any>> -> memref<2x512xf32, #tpu.memory_space<any>>
    %4 = tpu.memref_slice %arg3[%c1_i32] : memref<2x!tpu.dma_semaphore, #tpu.memory_space<semaphore_mem>> -> memref<1x!tpu.dma_semaphore, #tpu.memory_space<semaphore_mem>>
    %5 = tpu.memref_squeeze %4 : memref<1x!tpu.dma_semaphore, #tpu.memory_space<semaphore_mem>> -> memref<!tpu.dma_semaphore, #tpu.memory_space<semaphore_mem>>
    tpu.enqueue_dma source(%3 : memref<2x512xf32, #tpu.memory_space<any>>) target(%arg2 : memref<2x512xf32, #tpu.memory_space<any>>) target_semaphore(%5 : memref<!tpu.dma_semaphore, #tpu.memory_space<semaphore_mem>>)
    %c0_i32_3 = arith.constant 0 : i32
    %c0_i32_4 = arith.constant 0 : i32
    %c0_i32_5 = arith.constant 0 : i32
    %6 = tpu.memref_slice %arg0[%c0_i32_4, %c0_i32_5] : memref<2x1024xf32, #tpu.memory_space<any>> -> memref<2x512xf32, #tpu.memory_space<any>>
    %7 = tpu.memref_slice %arg3[%c0_i32_3] : memref<2x!tpu.dma_semaphore, #tpu.memory_space<semaphore_mem>> -> memref<1x!tpu.dma_semaphore, #tpu.memory_space<semaphore_mem>>
    %8 = tpu.memref_squeeze %7 : memref<1x!tpu.dma_semaphore, #tpu.memory_space<semaphore_mem>> -> memref<!tpu.dma_semaphore, #tpu.memory_space<semaphore_mem>>
    tpu.wait_dma2 semaphore(%8 : memref<!tpu.dma_semaphore, #tpu.memory_space<semaphore_mem>>) src(%6 : memref<2x512xf32, #tpu.memory_space<any>>) dst(%arg1 : memref<2x512xf32, #tpu.memory_space<any>>)
    %c1_i32_6 = arith.constant 1 : i32
    %c0_i32_7 = arith.constant 0 : i32
    %c512_i32_8 = arith.constant 512 : i32
    %9 = tpu.memref_slice %arg0[%c0_i32_7, %c512_i32_8] : memref<2x1024xf32, #tpu.memory_space<any>> -> memref<2x512xf32, #tpu.memory_space<any>>
    %10 = tpu.memref_slice %arg3[%c1_i32_6] : memref<2x!tpu.dma_semaphore, #tpu.memory_space<semaphore_mem>> -> memref<1x!tpu.dma_semaphore, #tpu.memory_space<semaphore_mem>>
    %11 = tpu.memref_squeeze %10 : memref<1x!tpu.dma_semaphore, #tpu.memory_space<semaphore_mem>> -> memref<!tpu.dma_semaphore, #tpu.memory_space<semaphore_mem>>
    tpu.wait_dma2 semaphore(%11 : memref<!tpu.dma_semaphore, #tpu.memory_space<semaphore_mem>>) src(%9 : memref<2x512xf32, #tpu.memory_space<any>>) dst(%arg2 : memref<2x512xf32, #tpu.memory_space<any>>)
    return
  }
}

</mosaic_0001>

<llo_original>
// kernel: tpu_custom_call.1
$region0: #{tpu_custom_call.1}
  #allocation0 [shape = 'u32[]', space=smem, size = 0x4, offset = 0x4, fixed_abs, tag = 'smem constant byte address 0x4 - core index']
  #allocation1 [shape = 'u32[72,128]{1,0:T(1,128)}', space=vmem, size = 0x9000, scoped, tag = 'internal scratch']
  #allocation2 [shape = 's32[2]{0}', space=sflag, size = 0x8, scoped, tag = 'scratch operand']
  #allocation3 [shape = 's32[]', space=sflag, size = 0x4, offset = 0, fixed_abs, tag = 'sflag constant byte address 0x0 - dummy sync flag']
  #allocation4 [shape = 'u32[0]{0}', space=smem, size = 0, offset = 0, fixed_abs, tag = 'smem constant byte address 0x0 - null']
  #allocation5 [shape = 's32[]', space=sflag, size = 0x4, offset = 0, fixed_abs, tag = 'sflag constant byte address 0x0 - dummy sync flag']
  #allocation6 [shape = 'u32[0]{0}', space=smem, size = 0, offset = 0, fixed_abs, tag = 'smem constant byte address 0x0 - null']
  %s0 = inlined_call_operand.hbm [shape: f32[2,1024], index: 0, kind: input, shape index: {}]
  %s1 = inlined_call_operand.hbm [shape: f32[2,512], index: 1, kind: output, shape index: {0}]
  %s2 = inlined_call_operand.hbm [shape: f32[2,512], index: 2, kind: output, shape index: {1}]
  %3 = xla_tuple %s1, %s2
  %s4 = sld [smem:[#allocation0]]
  $region2: #{tpu_custom_call.1} parent=0
    _
  %s6 = ssub.s32 1, %s4
  %s7 = scalar_select 0, %s6, %s4
  %s9 = sshll.u32 1, 14
  %s10 = sxor.u32 4294967295, %s9
  %s12 = sshll.u32 %s0, 4
  %s13 = int_to_ptr.hbm [resolvable:$true] %s12
  %s14 = sshll.u32 %s1, 4
  %s15 = int_to_ptr.hbm [resolvable:$true] %s14
  %18 = dma.general %s13, 128, %s15, [#allocation2], [#allocation3], [#allocation4], 0, 0
  %s19 = scalar_lea.hbm %s0, 8
  %s20 = scalar_lea.sflag [#allocation2], 1
  %s22 = sshll.u32 1, 14
  %s23 = sxor.u32 4294967295, %s22
  %s25 = sshll.u32 %s19, 4
  %s26 = int_to_ptr.hbm [resolvable:$true] %s25
  %s27 = sshll.u32 %s2, 4
  %s28 = int_to_ptr.hbm [resolvable:$true] %s27
  %31 = dma.general %s26, 128, %s28, %s20, [#allocation5], [#allocation6], 0, 0
  %s32 = smul.u32 2, 1
  %s33 = smul.u32 %s32, 4
  %s34 = sshll.u32 %s33, 4
  %35 = dma.done [#allocation2], %s34
  %s36 = sshll.u32 %s33, 4
  %37 = dma.done %s20, %s36
  %38 = vsyncmov [#allocation2]
  %s39 = vpop.sfrf %38
  %p40 = scmp.eq.s32.totalorder %s39, 0
  %p41 = pneg %p40
  %43 = shalt.err (%p41)
  %s44 = scalar_lea.sflag [#allocation2], 1
  %45 = vsyncmov %s44
  %s46 = vpop.sfrf %45
  %p47 = scmp.eq.s32.totalorder %s46, 0
  %p48 = pneg %p47
  %50 = shalt.err (%p48)

</llo_original>
